<compile_context>
chip_gen: v5e
topology: v5e:2x2
jax: 0.10.0
libtpu: 0.0.40
codegen_flags: <defaults>
</compile_context>

<pallas_src>
import functools

import jax
import jax.numpy as jnp
from jax.experimental import pallas as pl
from jax.experimental.pallas import tpu as pltpu

LANES = 128
SUBLANES = 8
# 4096 x 128 x f32 = 2 MiB per buffer; with 2-3 double-buffered operands this is
# ~8-12 MiB of pipelined VMEM -> safe even on v7x (64 MiB physical VMEM).
MAX_TILE_ROWS = 4096

# Padding sentinel for the sum/mean path: focal loss of (pred=+100, true=1) is
# exactly 0 in f32 (bce finite, (1 - sigmoid(100))**gamma == 0), so padded
# elements contribute nothing and no per-element mask is needed.
PAD_PRED = 100.0
PAD_TRUE = 1.0


def _cdiv(a, b):
    return -(-a // b)


def _round_up(x, m):
    return _cdiv(x, m) * m


def _vmem_capacity_bytes():
    try:
        return int(pltpu.get_tpu_info().vmem_capacity_bytes)
    except Exception:
        return 64 * 1024 * 1024  # conservative (v7x per-core VMEM)


def _fast_pow(t, gamma):
    """t ** gamma with cheap VPU/EUP paths for small integer / half-integer gamma."""
    g = float(gamma)
    if g == 0.0:
        return jnp.ones_like(t)
    if g == 1.0:
        return t
    two_g = 2.0 * g
    if two_g.is_integer() and 0 < int(two_g) <= 8:
        k2 = int(two_g)
        if k2 % 2 == 0:  # integer exponent: repeated multiply (pure VPU)
            r = t
            for _ in range(k2 // 2 - 1):
                r = r * t
            return r
        # half-integer exponent (e.g. gamma=1.5): t**k * sqrt(t)
        r = jnp.sqrt(t)
        for _ in range(k2 // 2):
            r = r * t
        return r
    # Generic fallback for unusual gammas (lowers to exp(gamma*log(t))).
    return t ** g


def _focal_elementwise(x, y, gamma, alpha):
    """Per-element focal loss (stable BCEWithLogits * alpha_factor * modulating)."""
    x = x.astype(jnp.float32)
    y = y.astype(jnp.float32)
    e = jnp.exp(-jnp.abs(x))                 # exp(-|x|): computed once, reused twice
    # Numerically stable BCEWithLogitsLoss(reduction='none'):
    #   max(x, 0) - x*y + log(1 + exp(-|x|))
    bce = jnp.maximum(x, 0.0) - x * y + jnp.log1p(e)
    # sigmoid(x) derived from the same exp(-|x|) (no second exp).
    inv = pl.reciprocal(1.0 + e)             # 1 / (1 + exp(-|x|))
    pred_prob = jnp.where(x >= 0.0, inv, e * inv)
    p_t = y * pred_prob + (1.0 - y) * (1.0 - pred_prob)
    alpha_factor = y * alpha + (1.0 - y) * (1.0 - alpha)
    modulating_factor = _fast_pow(1.0 - p_t, gamma)
    return bce * alpha_factor * modulating_factor


def _focal_none_kernel(pred_ref, true_ref, out_ref, *, gamma, alpha):
    loss = _focal_elementwise(pred_ref[...], true_ref[...], gamma, alpha)
    out_ref[...] = loss.astype(out_ref.dtype)


def _focal_sum_kernel(pred_ref, true_ref, out_ref, acc_ref, *, gamma, alpha):
    s = pl.program_id(1)

    @pl.when(s == 0)
    def _():
        acc_ref[...] = jnp.zeros_like(acc_ref)

    loss = _focal_elementwise(pred_ref[...], true_ref[...], gamma, alpha)

    # Vector accumulator: fold the tile down to (8, 128) with pure VPU adds
    # (reshape along sublane groups is layout-free; no XLU cross-lane reduce,
    # no SMEM scalar round-trip per step).
    acc_ref[...] += loss.reshape(-1, SUBLANES, LANES).sum(axis=0)

    @pl.when(s == pl.num_programs(1) - 1)
    def _():
        out_ref[...] = acc_ref[...].reshape(out_ref.shape)


def _choose_tiling(n, vmem_cap, num_bufs, want_parallel):
    """Pick (padded_rows, tile_rows, num_parallel, steps) for n elements."""
    rows = _cdiv(max(n, 1), LANES)
    rows8 = _round_up(rows, SUBLANES)
    # Largest tile keeping double-buffered pipelined f32 traffic under ~1/4 VMEM.
    budget = vmem_cap // 4
    max_rows = (budget // (num_bufs * 2 * LANES * 4)) // SUBLANES * SUBLANES
    max_rows = max(SUBLANES, min(MAX_TILE_ROWS, max_rows))
    blocks = _cdiv(rows8, max_rows)
    num_parallel = want_parallel if blocks >= want_parallel else 1
    blocks = _round_up(blocks, num_parallel)
    tile_rows = _round_up(_cdiv(rows8, blocks), SUBLANES)
    padded_rows = blocks * tile_rows
    return padded_rows, tile_rows, num_parallel, blocks // num_parallel


def _pad_to_2d(a, padded_rows, pad_value=0.0):
    flat = a.reshape(-1)
    pad = padded_rows * LANES - flat.shape[0]
    if pad:
        flat = jnp.pad(flat, (0, pad), constant_values=pad_value)
    return flat.reshape(padded_rows, LANES)


def _vmem_limit(vmem_cap, need_bytes):
    return int(min(vmem_cap * 3 // 4, max(need_bytes, 16 << 20)))


def focal_loss(pred, true, *, gamma=1.5, alpha=0.25, reduction="mean"):
    """JAX/Pallas equivalent of FocalLoss(nn.BCEWithLogitsLoss(reduction=reduction))."""
    assert pred.shape == true.shape
    orig_shape = pred.shape
    n = int(pred.size)
    vmem_cap = _vmem_capacity_bytes()

    if reduction in ("mean", "sum"):
        padded_rows, tile_rows, num_parallel, steps = _choose_tiling(
            n, vmem_cap, num_bufs=2, want_parallel=2)
        # Sentinel padding makes padded elements contribute exactly 0 (no mask).
        pred2d = _pad_to_2d(pred, padded_rows, PAD_PRED)
        true2d = _pad_to_2d(true, padded_rows, PAD_TRUE)
        kernel = functools.partial(_focal_sum_kernel, gamma=gamma, alpha=alpha)
        partials = pl.pallas_call(
            kernel,
            out_shape=jax.ShapeDtypeStruct(
                (num_parallel, SUBLANES, LANES), jnp.float32),
            grid_spec=pltpu.PrefetchScalarGridSpec(
                num_scalar_prefetch=0,
                grid=(num_parallel, steps),
                in_specs=[
                    pl.BlockSpec((tile_rows, LANES), lambda p, s: (p * steps + s, 0)),
                    pl.BlockSpec((tile_rows, LANES), lambda p, s: (p * steps + s, 0)),
                ],
                out_specs=pl.BlockSpec((1, SUBLANES, LANES), lambda p, s: (p, 0, 0)),
                scratch_shapes=[pltpu.VMEM((SUBLANES, LANES), jnp.float32)],
            ),
            compiler_params=pltpu.CompilerParams(
                dimension_semantics=("parallel", "arbitrary"),
                vmem_limit_bytes=_vmem_limit(
                    vmem_cap, 4 * tile_rows * LANES * 4 + (4 << 20)),
            ),
        )(pred2d, true2d)
        total = jnp.sum(partials)  # tiny (num_parallel x 8 x 128) final reduce
        if reduction == "mean":
            return total / jnp.float32(n)
        return total

    # reduction == 'none'
    padded_rows, tile_rows, _, _ = _choose_tiling(
        n, vmem_cap, num_bufs=3, want_parallel=1)
    pred2d = _pad_to_2d(pred, padded_rows)
    true2d = _pad_to_2d(true, padded_rows)
    blocks = padded_rows // tile_rows
    out2d = pl.pallas_call(
        functools.partial(_focal_none_kernel, gamma=gamma, alpha=alpha),
        out_shape=jax.ShapeDtypeStruct((padded_rows, LANES), pred.dtype),
        grid_spec=pltpu.PrefetchScalarGridSpec(
            num_scalar_prefetch=0,
            grid=(blocks,),
            in_specs=[
                pl.BlockSpec((tile_rows, LANES), lambda i: (i, 0)),
                pl.BlockSpec((tile_rows, LANES), lambda i: (i, 0)),
            ],
            out_specs=pl.BlockSpec((tile_rows, LANES), lambda i: (i, 0)),
        ),
        compiler_params=pltpu.CompilerParams(
            dimension_semantics=("parallel",),
            vmem_limit_bytes=_vmem_limit(
                vmem_cap, 6 * tile_rows * LANES * 4 + (4 << 20)),
        ),
    )(pred2d, true2d)
    return out2d.reshape(-1)[:n].reshape(orig_shape)


def _focal_reference(pred, true, gamma, alpha):
    """Pure-JAX reference (mirrors the PyTorch module, reduction='none')."""
    x = pred.astype(jnp.float32)
    y = true.astype(jnp.float32)
    bce = jnp.maximum(x, 0.0) - x * y + jnp.log1p(jnp.exp(-jnp.abs(x)))
    pred_prob = jax.nn.sigmoid(x)
    p_t = y * pred_prob + (1.0 - y) * (1.0 - pred_prob)
    alpha_factor = y * alpha + (1.0 - y) * (1.0 - alpha)
    modulating_factor = (1.0 - p_t) ** gamma
    return bce * alpha_factor * modulating_factor


# TODO(synk): no custom VJP is provided; (1-p_t)**gamma has an inf-grad corner at
# p_t == 1 if this kernel is ever differentiated through.

if __name__ == "__main__":
    key = jax.random.PRNGKey(0)
    k1, k2, k3, k4 = jax.random.split(key, 4)

    # NCHW-style detection-head logits / targets.
    pred = jax.random.normal(k1, (2, 4, 16, 16), dtype=jnp.float32) * 2.0
    true = (jax.random.uniform(k2, (2, 4, 16, 16)) > 0.7).astype(jnp.float32)

    loss_mean = focal_loss(pred, true, gamma=1.5, alpha=0.25, reduction="mean")
    loss_sum = focal_loss(pred, true, gamma=1.5, alpha=0.25, reduction="sum")
    loss_none = focal_loss(pred, true, gamma=1.5, alpha=0.25, reduction="none")
    jax.block_until_ready((loss_mean, loss_sum, loss_none))

    ref = _focal_reference(pred, true, 1.5, 0.25)
    assert jnp.allclose(loss_none, ref, atol=1e-5, rtol=1e-5)
    assert jnp.allclose(loss_mean, ref.mean(), atol=1e-5, rtol=1e-5)
    assert jnp.allclose(loss_sum, ref.sum(), atol=1e-4, rtol=1e-5)

    # Ragged size (not a multiple of 128) exercises the pad path (sentinel
    # padding must contribute exactly zero to the mean).
    pred_r = jax.random.normal(k3, (3, 5, 7), dtype=jnp.float32)
    true_r = (jax.random.uniform(k4, (3, 5, 7)) > 0.5).astype(jnp.float32)
    lm_r = focal_loss(pred_r, true_r, reduction="mean")
    ln_r = focal_loss(pred_r, true_r, reduction="none")
    jax.block_until_ready((lm_r, ln_r))
    ref_r = _focal_reference(pred_r, true_r, 1.5, 0.25)
    assert jnp.allclose(ln_r, ref_r, atol=1e-5, rtol=1e-5)
    assert jnp.allclose(lm_r, ref_r.mean(), atol=1e-5, rtol=1e-5)

    # bf16 logits exercise the mixed-precision path (bf16 in -> bf16 out for 'none').
    pred_b = (jax.random.normal(k1, (2, 4, 16, 16)) * 2.0).astype(jnp.bfloat16)
    true_b = (jax.random.uniform(k2, (2, 4, 16, 16)) > 0.7).astype(jnp.bfloat16)
    lm_b = focal_loss(pred_b, true_b, reduction="mean")
    ln_b = focal_loss(pred_b, true_b, reduction="none")
    jax.block_until_ready((lm_b, ln_b))
    ref_b = _focal_reference(pred_b, true_b, 1.5, 0.25)
    assert ln_b.dtype == jnp.bfloat16
    assert jnp.allclose(ln_b.astype(jnp.float32), ref_b, atol=2e-2, rtol=2e-2)
    assert jnp.allclose(lm_b, ref_b.mean(), atol=2e-3, rtol=2e-3)

    print("KERNEL_OK")
</pallas_src>

<mosaic_0001>
module attributes {stable_mosaic.version = 11 : i64} {
  func.func @_focal_sum_kernel(%arg0: i32, %arg1: i32, %arg2: memref<16x128xf32, #tpu.memory_space<vmem>>, %arg3: memref<16x128xf32, #tpu.memory_space<vmem>>, %arg4: memref<1x8x128xf32, #tpu.memory_space<vmem>>, %arg5: memref<8x128xf32, #tpu.memory_space<vmem>>) attributes {dimension_semantics = [#tpu.dimension_semantics<parallel>, #tpu.dimension_semantics<arbitrary>], iteration_bounds = array<i64: 1, 1>, scalar_prefetch = 0 : i64, scratch_operands = 1 : i64, tpu.core_type = #tpu.core_type<tc>, window_params = [{transform_indices = @transform_0, window_bounds = array<i64: 16, 128>}, {transform_indices = @transform_1, window_bounds = array<i64: 16, 128>}, {transform_indices = @transform_2, window_bounds = array<i64: 1, 8, 128>}]} {
    %c0_i32 = arith.constant 0 : i32
    %0 = arith.cmpi eq, %arg1, %c0_i32 : i32
    %1 = arith.extui %0 : i1 to i32
    %c0_i32_0 = arith.constant 0 : i32
    %2 = arith.cmpi ne, %1, %c0_i32_0 : i32
    scf.if %2 {
      %cst_20 = arith.constant 0.000000e+00 : f32
      %50 = vector.broadcast %cst_20 : f32 to vector<8x128xf32>
      %c0_21 = arith.constant 0 : index
      %c0_22 = arith.constant 0 : index
      %51 = vector.load %arg5[%c0_21, %c0_22] : memref<8x128xf32, #tpu.memory_space<vmem>>, vector<8x128xf32>
      tpu.vector_store %arg5[%c0_21, %c0_22], %50 {strides = array<i32>} : memref<8x128xf32, #tpu.memory_space<vmem>>, vector<8x128xf32>,
    } else {
    }
    %c0 = arith.constant 0 : index
    %c0_1 = arith.constant 0 : index
    %3 = vector.load %arg2[%c0, %c0_1] : memref<16x128xf32, #tpu.memory_space<vmem>>, vector<16x128xf32>
    %c0_2 = arith.constant 0 : index
    %c0_3 = arith.constant 0 : index
    %4 = vector.load %arg3[%c0_2, %c0_3] : memref<16x128xf32, #tpu.memory_space<vmem>>, vector<16x128xf32>
    %5 = math.absf %3 : vector<16x128xf32>
    %cst = arith.constant 0.000000e+00 : f32
    %6 = vector.broadcast %cst : f32 to vector<16x128xf32>
    %7 = arith.subf %6, %5 : vector<16x128xf32>
    %8 = math.exp %7 : vector<16x128xf32>
    %cst_4 = arith.constant 0.000000e+00 : f32
    %9 = vector.broadcast %cst_4 : f32 to vector<16x128xf32>
    %10 = arith.maximumf %3, %9 : vector<16x128xf32>
    %11 = arith.mulf %3, %4 : vector<16x128xf32>
    %12 = arith.subf %10, %11 : vector<16x128xf32>
    %13 = math.log1p %8 : vector<16x128xf32>
    %14 = arith.addf %12, %13 : vector<16x128xf32>
    %cst_5 = arith.constant 1.000000e+00 : f32
    %15 = vector.broadcast %cst_5 : f32 to vector<16x128xf32>
    %16 = arith.addf %15, %8 : vector<16x128xf32>
    %17 = tpu.reciprocal %16 : vector<16x128xf32> -> vector<16x128xf32>
    %cst_6 = arith.constant 0.000000e+00 : f32
    %18 = vector.broadcast %cst_6 : f32 to vector<16x128xf32>
    %19 = arith.cmpf oge, %3, %18 : vector<16x128xf32>
    %20 = arith.mulf %8, %17 : vector<16x128xf32>
    %21 = arith.select %19, %17, %20 : vector<16x128xi1>, vector<16x128xf32>
    %22 = arith.mulf %4, %21 : vector<16x128xf32>
    %cst_7 = arith.constant 1.000000e+00 : f32
    %23 = vector.broadcast %cst_7 : f32 to vector<16x128xf32>
    %24 = arith.subf %23, %4 : vector<16x128xf32>
    %cst_8 = arith.constant 1.000000e+00 : f32
    %25 = vector.broadcast %cst_8 : f32 to vector<16x128xf32>
    %26 = arith.subf %25, %21 : vector<16x128xf32>
    %27 = arith.mulf %24, %26 : vector<16x128xf32>
    %28 = arith.addf %22, %27 : vector<16x128xf32>
    %cst_9 = arith.constant 2.500000e-01 : f32
    %29 = vector.broadcast %cst_9 : f32 to vector<16x128xf32>
    %30 = arith.mulf %4, %29 : vector<16x128xf32>
    %cst_10 = arith.constant 1.000000e+00 : f32
    %31 = vector.broadcast %cst_10 : f32 to vector<16x128xf32>
    %32 = arith.subf %31, %4 : vector<16x128xf32>
    %cst_11 = arith.constant 7.500000e-01 : f32
    %33 = vector.broadcast %cst_11 : f32 to vector<16x128xf32>
    %34 = arith.mulf %32, %33 : vector<16x128xf32>
    %35 = arith.addf %30, %34 : vector<16x128xf32>
    %cst_12 = arith.constant 1.000000e+00 : f32
    %36 = vector.broadcast %cst_12 : f32 to vector<16x128xf32>
    %37 = arith.subf %36, %28 : vector<16x128xf32>
    %38 = math.sqrt %37 : vector<16x128xf32>
    %39 = arith.mulf %38, %37 : vector<16x128xf32>
    %40 = arith.mulf %14, %35 : vector<16x128xf32>
    %41 = arith.mulf %40, %39 : vector<16x128xf32>
    %c0_13 = arith.constant 0 : index
    %c0_14 = arith.constant 0 : index
    %42 = vector.load %arg5[%c0_13, %c0_14] : memref<8x128xf32, #tpu.memory_space<vmem>>, vector<8x128xf32>
    %43 = vector.shape_cast %41 : vector<16x128xf32> to vector<2x8x128xf32>
    %cst_15 = arith.constant dense<0.000000e+00> : vector<8x128xf32>
    %44 = vector.multi_reduction <add>, %43, %cst_15 [0] : vector<2x8x128xf32> to vector<8x128xf32>
    %45 = arith.addf %42, %44 : vector<8x128xf32>
    %c0_16 = arith.constant 0 : index
    %c0_17 = arith.constant 0 : index
    %46 = vector.load %arg5[%c0_16, %c0_17] : memref<8x128xf32, #tpu.memory_space<vmem>>, vector<8x128xf32>
    tpu.vector_store %arg5[%c0_16, %c0_17], %45 {strides = array<i32>} : memref<8x128xf32, #tpu.memory_space<vmem>>, vector<8x128xf32>,
    %c0_i32_18 = arith.constant 0 : i32
    %47 = arith.cmpi eq, %arg1, %c0_i32_18 : i32
    %48 = arith.extui %47 : i1 to i32
    %c0_i32_19 = arith.constant 0 : i32
    %49 = arith.cmpi ne, %48, %c0_i32_19 : i32
    scf.if %49 {
      %c0_20 = arith.constant 0 : index
      %c0_21 = arith.constant 0 : index
      %50 = vector.load %arg5[%c0_20, %c0_21] : memref<8x128xf32, #tpu.memory_space<vmem>>, vector<8x128xf32>
      %51 = vector.shape_cast %50 : vector<8x128xf32> to vector<1x8x128xf32>
      %c0_22 = arith.constant 0 : index
      %c0_23 = arith.constant 0 : index
      %c0_24 = arith.constant 0 : index
      %52 = vector.load %arg4[%c0_22, %c0_23, %c0_24] : memref<1x8x128xf32, #tpu.memory_space<vmem>>, vector<1x8x128xf32>
      tpu.vector_store %arg4[%c0_22, %c0_23, %c0_24], %51 {strides = array<i32>} : memref<1x8x128xf32, #tpu.memory_space<vmem>>, vector<1x8x128xf32>,
    } else {
    }
    return
  }
  func.func @transform_0(%arg0: i32, %arg1: i32) -> (i32, i32) {
    %c1_i32 = arith.constant 1 : i32
    %0 = arith.muli %arg0, %c1_i32 : i32
    %1 = arith.addi %0, %arg1 : i32
    %c0_i32 = arith.constant 0 : i32
    %c0_i32_0 = arith.constant 0 : i32
    return %1, %c0_i32 : i32, i32
  }
  func.func @transform_1(%arg0: i32, %arg1: i32) -> (i32, i32) {
    %c1_i32 = arith.constant 1 : i32
    %0 = arith.muli %arg0, %c1_i32 : i32
    %1 = arith.addi %0, %arg1 : i32
    %c0_i32 = arith.constant 0 : i32
    %c0_i32_0 = arith.constant 0 : i32
    return %1, %c0_i32 : i32, i32
  }
  func.func @transform_2(%arg0: i32, %arg1: i32) -> (i32, i32, i32) {
    %c0_i32 = arith.constant 0 : i32
    %c0_i32_0 = arith.constant 0 : i32
    %c0_i32_1 = arith.constant 0 : i32
    return %arg0, %c0_i32, %c0_i32_0 : i32, i32, i32
  }
}

</mosaic_0001>

<llo_original>
// kernel: tpu_custom_call.1
$region0: #{tpu_custom_call.1}
  #allocation0 [shape = 'u32[]', space=smem, size = 0x4, offset = 0x4, fixed_abs, tag = 'smem constant byte address 0x4 - core index']
  #allocation1 [shape = 'u32[72,128]{1,0:T(1,128)}', space=vmem, size = 0x9000, scoped, tag = 'internal scratch']
  #allocation2 [shape = 'f32[8,128]{1,0:T(8,128)}', space=vmem, size = 0x1000, scoped, tag = 'scratch operand']
  %s0 = inlined_call_operand.hbm [shape: f32[16,128], index: 0, kind: input, shape index: {}]
  %s1 = inlined_call_operand.hbm [shape: f32[16,128], index: 1, kind: input, shape index: {}]
  %s2 = inlined_call_operand.hbm [shape: f32[1,8,128], index: 2, kind: output, shape index: {}]
  %s3 = sld [smem:[#allocation0]]
  $region34: #{tpu_custom_call.1} parent=0
    _
  %s5 = ssub.s32 1, %s3
  %s6 = scalar_select 0, %s5, %s3
  $region1: #{tpu_custom_call.1} parent=0
    #allocation3 [shape = 'u8[8192]{0}', space=vmem, size = 0x2000, scoped, tag = 'input window, operand 0, single buffered']
    #allocation4 [shape = 's32[1]{0}', space=sflag, size = 0x4, scoped, tag = 'scoped memory for tpu_custom_call.1']
    #allocation5 [shape = 's32[1]{0}', space=sflag, size = 0x4, scoped, tag = 'scoped memory for tpu_custom_call.1']
    #allocation6 [shape = 'u8[8192]{0}', space=vmem, size = 0x2000, scoped, tag = 'input window, operand 1, single buffered']
    #allocation7 [shape = 's32[1]{0}', space=sflag, size = 0x4, scoped, tag = 'scoped memory for tpu_custom_call.1']
    #allocation8 [shape = 'u8[4096]{0}', space=vmem, size = 0x1000, scoped, tag = 'output window, operand 0, single buffered']
    %7 = vsyncpa [#allocation4], 0
    %8 = vsyncpa [#allocation7], 0
    %9 = vsyncpa [#allocation5], 0
    // Predicated region
    $region2: #{tpu_custom_call.1} parent=1 // pred_check
      _
    $region3: #{tpu_custom_call.1} parent=1 // pred_check_branch
      %11 = sbr.rel (0) target = $region5
    $region4: #{tpu_custom_call.1} parent=1 // pred_region
      %s12 = sadd.s32 0, 0
      %s13 = smul.u32 2, %s12
      %15 = vsyncadd [#allocation4], 0
      %s16 = smul.addr %s13, 8
      %s17 = scalar_lea.hbm %s0, %s16
      %s18 = sshll.u32 %s17, 4
      %s19 = int_to_ptr.hbm [resolvable:$true] %s18
      %s20 = sshll.u32 [#allocation3], 4
      %s21 = int_to_ptr.vmem [resolvable:$true] %s20
      %26 = dma.hbm_to_vmem [thread:$0]  %s19, 256, %s21, [#allocation4], 128, 128, 8
    $region5: #{tpu_custom_call.1} parent=1 // pred_fallthru
      _
    // Predicated region
    $region6: #{tpu_custom_call.1} parent=1 // pred_check
      _
    $region7: #{tpu_custom_call.1} parent=1 // pred_check_branch
      %28 = sbr.rel (0) target = $region9
    $region8: #{tpu_custom_call.1} parent=1 // pred_region
      %s29 = sadd.s32 0, 0
      %s30 = smul.u32 2, %s29
      %32 = vsyncadd [#allocation7], 0
      %s33 = smul.addr %s30, 8
      %s34 = scalar_lea.hbm %s1, %s33
      %s35 = sshll.u32 %s34, 4
      %s36 = int_to_ptr.hbm [resolvable:$true] %s35
      %s37 = sshll.u32 [#allocation6], 4
      %s38 = int_to_ptr.vmem [resolvable:$true] %s37
      %43 = dma.hbm_to_vmem [thread:$0]  %s36, 256, %s38, [#allocation7], 128, 128, 8
    $region9: #{tpu_custom_call.1} parent=1 // pred_fallthru
      _
    // Predicated region
    $region10: #{tpu_custom_call.1} parent=1 // pred_check
      _
    $region11: #{tpu_custom_call.1} parent=1 // pred_check_branch
      %45 = sbr.rel (0) target = $region13
    $region12: #{tpu_custom_call.1} parent=1 // pred_region
      %47 = dma.done [#allocation4], 256
    $region13: #{tpu_custom_call.1} parent=1 // pred_fallthru
      _
    // Predicated region
    $region14: #{tpu_custom_call.1} parent=1 // pred_check
      _
    $region15: #{tpu_custom_call.1} parent=1 // pred_check_branch
      %49 = sbr.rel (0) target = $region17
    $region16: #{tpu_custom_call.1} parent=1 // pred_region
      %51 = dma.done [#allocation7], 256
    $region17: #{tpu_custom_call.1} parent=1 // pred_fallthru
      _
    %s52 = sadd.s32 0, 0
    %s53 = smul.u32 2, %s52
    %s54 = sadd.s32 0, 0
    %s55 = smul.u32 2, %s54
    %p56 = scmp.eq.s32.totalorder 0, 0
    // Predicated region
    $region18: #{tpu_custom_call.1} parent=1 // pred_check
      %p57 = pneg %p56
    $region19: #{tpu_custom_call.1} parent=1 // pred_check_branch
      %59 = sbr.rel (%p57) target = $region21
    $region20: #{tpu_custom_call.1} parent=1 // pred_region
      %60 = vst [vmem:[#allocation2] sm:$0xff] 0.0
    $region21: #{tpu_custom_call.1} parent=1 // pred_fallthru
      _
    %v61 = vld [vmem:[#allocation3] sm:$0xff]
    %v62 = vld [vmem:[#allocation3 + $0x8] sm:$0xff]
    %v63 = vld [vmem:[#allocation6] sm:$0xff]
    %v64 = vld [vmem:[#allocation6 + $0x8] sm:$0xff]
    %v65 = vand.u32 2147483647, %v61
    %v66 = vand.u32 2147483647, %v62
    %v67 = vsub.f32 0.0, %v65
    %v68 = vsub.f32 0.0, %v66
    %v69 = vmul.f32 %v67, 1.442695
    %v70 = vpow.pop %v69
    %v71 = vmul.f32 %v68, 1.442695
    %v72 = vpow.pop %v71
    %v73 = vmax.f32 %v61, 0.0
    %v74 = vmax.f32 %v62, 0.0
    %v75 = vmul.f32 %v61, %v63
    %v76 = vmul.f32 %v62, %v64
    %v77 = vsub.f32 %v73, %v75
    %v78 = vsub.f32 %v74, %v76
    %v79 = vadd.f32 %v70, 1.0
    %v80 = vlog2.pop %v79
    %v81 = vmul.f32 %v80, 0.6931472
    %v82 = vmul.f32 -0.5, %v70
    %v83 = vadd.f32 %v82, 1.0
    %v84 = vmul.f32 %v83, %v70
    %v85 = vand.u32 2147483647, %v70
    %vm86 = vcmp.lt.f32.partialorder %v85, 0.0004427343
    %v87 = vsel %vm86, %v84, %v81
    %v88 = vadd.f32 %v72, 1.0
    %v89 = vlog2.pop %v88
    %v90 = vmul.f32 %v89, 0.6931472
    %v91 = vmul.f32 -0.5, %v72
    %v92 = vadd.f32 %v91, 1.0
    %v93 = vmul.f32 %v92, %v72
    %v94 = vand.u32 2147483647, %v72
    %vm95 = vcmp.lt.f32.partialorder %v94, 0.0004427343
    %v96 = vsel %vm95, %v93, %v90
    %v97 = vadd.f32 %v77, %v87
    %v98 = vadd.f32 %v78, %v96
    %v99 = vadd.f32 %v70, 1.0
    %v100 = vadd.f32 %v72, 1.0
    %v101 = vrcp.pop %v99
    %v102 = vmul.f32 %v99, %v101
    %v103 = vsub.f32 1.0, %v102
    %v104 = vmul.f32 %v101, %v103
    %v105 = vadd.f32 %v101, %v104
    %vm106 = vweird.f32 %v99
    %vm107 = vweird.f32 %v101
    %vm108 = vmor %vm106, %vm107
    %v109 = vsel %vm108, %v101, %v105
    %v110 = vand.u32 2147483647, %v99
    %vm111 = vcmp.eq.f32.partialorder %v110, 8.507059e+37
    %v112 = vand.u32 %v99, 2147483648
    %v113 = vor.u32 1.1754944e-38, %v112
    %v114 = vsel %vm111, %v113, %v109
    %v115 = vrcp.pop %v100
    %v116 = vmul.f32 %v100, %v115
    %v117 = vsub.f32 1.0, %v116
    %v118 = vmul.f32 %v115, %v117
    %v119 = vadd.f32 %v115, %v118
    %vm120 = vweird.f32 %v100
    %vm121 = vweird.f32 %v115
    %vm122 = vmor %vm120, %vm121
    %v123 = vsel %vm122, %v115, %v119
    %v124 = vand.u32 2147483647, %v100
    %vm125 = vcmp.eq.f32.partialorder %v124, 8.507059e+37
    %v126 = vand.u32 %v100, 2147483648
    %v127 = vor.u32 1.1754944e-38, %v126
    %v128 = vsel %vm125, %v127, %v123
    %vm129 = vcmp.ge.f32.partialorder %v61, 0.0
    %vm130 = vcmp.ge.f32.partialorder %v62, 0.0
    %v131 = vmul.f32 %v70, %v114
    %v132 = vmul.f32 %v72, %v128
    %v133 = vsel %vm129, %v114, %v131
    %v134 = vsel %vm130, %v128, %v132
    %v135 = vmul.f32 %v63, %v133
    %v136 = vmul.f32 %v64, %v134
    %v137 = vsub.f32 1.0, %v63
    %v138 = vsub.f32 1.0, %v64
    %v139 = vsub.f32 1.0, %v133
    %v140 = vsub.f32 1.0, %v134
    %v141 = vmul.f32 %v137, %v139
    %v142 = vmul.f32 %v138, %v140
    %v143 = vadd.f32 %v135, %v141
    %v144 = vadd.f32 %v136, %v142
    %v145 = vmul.f32 %v63, 0.25
    %v146 = vmul.f32 %v64, 0.25
    %v147 = vmul.f32 %v137, 0.75
    %v148 = vmul.f32 %v138, 0.75
    %v149 = vadd.f32 %v145, %v147
    %v150 = vadd.f32 %v146, %v148
    %v151 = vsub.f32 1.0, %v143
    %v152 = vsub.f32 1.0, %v144
    %v153 = vrsqrt.pop %v151
    %v154 = vmul.f32 %v153, %v151
    %v155 = vmul.f32 %v154, %v153
    %v156 = vmul.f32 0.5, %v155
    %v157 = vsub.f32 1.5, %v156
    %v158 = vmul.f32 %v153, %v157
    %v159 = vmul.f32 %v151, %v158
    %vm160 = vcmp.eq.f32.partialorder %v151, inf
    %v161 = vsel %vm160, %v151, %v159
    %vm162 = vcmp.eq.f32.partialorder %v151, 0.0
    %v163 = vand.u32 %v151, 2147483648
    %v164 = vsel %vm162, %v163, %v161
    %v165 = vrsqrt.pop %v152
    %v166 = vmul.f32 %v165, %v152
    %v167 = vmul.f32 %v166, %v165
    %v168 = vmul.f32 0.5, %v167
    %v169 = vsub.f32 1.5, %v168
    %v170 = vmul.f32 %v165, %v169
    %v171 = vmul.f32 %v152, %v170
    %vm172 = vcmp.eq.f32.partialorder %v152, inf
    %v173 = vsel %vm172, %v152, %v171
    %vm174 = vcmp.eq.f32.partialorder %v152, 0.0
    %v175 = vand.u32 %v152, 2147483648
    %v176 = vsel %vm174, %v175, %v173
    %v177 = vmul.f32 %v164, %v151
    %v178 = vmul.f32 %v176, %v152
    %v179 = vmul.f32 %v97, %v149
    %v180 = vmul.f32 %v98, %v150
    %v181 = vmul.f32 %v179, %v177
    %v182 = vmul.f32 %v180, %v178
    %v183 = vld [vmem:[#allocation2] sm:$0xff]
    %v184 = vadd.f32 %v181, %v182
    %v185 = vadd.f32 %v183, %v184
    %186 = vst [vmem:[#allocation2] sm:$0xff] %v185
    // Predicated region
    $region22: #{tpu_custom_call.1} parent=1 // pred_check
      %p187 = pneg %p56
    $region23: #{tpu_custom_call.1} parent=1 // pred_check_branch
      %189 = sbr.rel (%p187) target = $region25
    $region24: #{tpu_custom_call.1} parent=1 // pred_region
      %v190 = vld [vmem:[#allocation2] sm:$0xff]
      %191 = vst [vmem:[#allocation8] sm:$0xff] %v190
    $region25: #{tpu_custom_call.1} parent=1 // pred_fallthru
      _
    // Predicated region
    $region26: #{tpu_custom_call.1} parent=1 // pred_check
      _
    $region27: #{tpu_custom_call.1} parent=1 // pred_check_branch
      %193 = sbr.rel (0) target = $region29
    $region28: #{tpu_custom_call.1} parent=1 // pred_region
      %195 = vsyncadd [#allocation5], 0
      %s197 = sshll.u32 [#allocation8], 4
      %s198 = int_to_ptr.vmem [resolvable:$true] %s197
      %s199 = sshll.u32 %s2, 4
      %s200 = int_to_ptr.hbm [resolvable:$true] %s199
      %202 = dma.vmem_to_hbm [thread:$0]  %s198, 128, %s200, [#allocation5]
    $region29: #{tpu_custom_call.1} parent=1 // pred_fallthru
      _
    // Predicated region
    $region30: #{tpu_custom_call.1} parent=1 // pred_check
      _
    $region31: #{tpu_custom_call.1} parent=1 // pred_check_branch
      %204 = sbr.rel (0) target = $region33
    $region32: #{tpu_custom_call.1} parent=1 // pred_region
      %206 = dma.done [#allocation5], 128
    $region33: #{tpu_custom_call.1} parent=1 // pred_fallthru
      _
    %207 = vsyncpa [#allocation4], 1
    %208 = vsyncpa [#allocation7], 1
    %209 = vsyncpa [#allocation5], 1

</llo_original>
